<compile_context>
chip_gen: v5e
topology: v5e:2x2
jax: 0.10.0
libtpu: 0.0.40
codegen_flags: <defaults>
</compile_context>

<pallas_src>
import functools

import jax
import jax.numpy as jnp
from jax.experimental import pallas as pl
from jax.experimental.pallas import tpu as pltpu


def _conv_bn_relu_kernel(x_ref, w_ref, shift_ref, o_ref, patch_ref, *, d_offsets):
    # x_ref     : (Nb, C_in, Gin)        flattened zero-padded images, spatial on lanes
    # w_ref     : (C_out, K*K*C_in)      conv weights with BN scale folded in
    # shift_ref : (C_out, 1)             folded BN shift
    # o_ref     : (Nb, C_out, Gc_pad)    lane-dense flat output (Gc_pad % 128 == 0)
    # patch_ref : VMEM (K*K*C_in, Nb*Gc_pad) im2col slab scratch
    nb, c_in, _ = x_ref.shape
    gc_pad = o_ref.shape[2]

    # Build the im2col slab once: all lane-shift copies are issued up front (XLU)
    # instead of being serialized with 9 tiny matmuls.
    for b in range(nb):
        xv = x_ref[b]                                     # (C_in, Gin), one VMEM load
        for t, d in enumerate(d_offsets):                 # static lane shifts
            patch_ref[t * c_in:(t + 1) * c_in, b * gc_pad:(b + 1) * gc_pad] = (
                xv[:, d:d + gc_pad])

    # Single contraction-(K*K*C_in) MXU matmul over all Nb*Gc_pad lane-dense columns.
    acc = jnp.dot(w_ref[...], patch_ref[...], preferred_element_type=jnp.float32)
    y = jnp.maximum(acc + shift_ref[...], 0.0)            # fused BN shift + ReLU (f32)

    for b in range(nb):                                   # unmasked lane-dense stores
        o_ref[b] = y[:, b * gc_pad:(b + 1) * gc_pad].astype(o_ref.dtype)


@functools.partial(jax.jit,
                   static_argnames=("eps", "compute_dtype", "images_per_step"))
def normal_block(x, w, gamma, beta, running_mean, running_var, *,
                 eps=1e-5, compute_dtype=jnp.float32, images_per_step=1):
    """ReLU(BatchNorm2d(Conv2d(x, w, k=3, s=1, p=1, bias=False))), inference-mode BN.

    x : (N, C_in, H, W) NCHW float32
    w : (C_out, C_in, 3, 3) PyTorch Conv2d weight layout
    gamma, beta, running_mean, running_var : (C_out,)
    returns (N, C_out, H, W) float32
    """
    N, C_in, H, W = x.shape
    C_out, _, K, _ = w.shape
    Nb = images_per_step
    assert N % Nb == 0, "images_per_step must divide the batch size"

    Wp = W + 2                                   # padded row stride (padding=1)
    G_full = H * Wp                              # flat positions covering all out rows
    Gc_pad = ((G_full + 127) // 128) * 128       # lane-dense output width (mult of 128)
    D_max = (K - 1) * Wp + (K - 1)               # largest static tap shift
    Gin_needed = Gc_pad + D_max
    base = (H + 2) * Wp
    extra_rows = max(0, -(-(Gin_needed - base) // Wp))   # extra zero rows for the tail
    Gin = (H + 2 + extra_rows) * Wp

    # --- glue (input-sized, cheap): cast + one zero-pad + one reshape --------------
    xc = x.astype(compute_dtype)
    x_pad = jnp.pad(xc, ((0, 0), (0, 0), (1, 1 + extra_rows), (1, 1)))
    x_flat = x_pad.reshape(N, C_in, Gin)

    # --- glue: fold inference BatchNorm scale into the conv weights ----------------
    inv_std = 1.0 / jnp.sqrt(running_var.astype(jnp.float32) + eps)
    scale = gamma.astype(jnp.float32) * inv_std                       # (C_out,)
    shift = (beta.astype(jnp.float32)
             - running_mean.astype(jnp.float32) * scale).reshape(C_out, 1)
    # rows ordered (kh, kw, ci) -> matches patch-slab rows t*C_in + ci, t = kh*K + kw
    w2d = jnp.transpose(w, (0, 2, 3, 1)).reshape(C_out, K * K * C_in)
    w2d = (w2d * scale[:, None]).astype(compute_dtype)

    d_offsets = tuple(kh * Wp + kw for kh in range(K) for kw in range(K))
    kernel = functools.partial(_conv_bn_relu_kernel, d_offsets=d_offsets)

    o_flat = pl.pallas_call(
        kernel,
        out_shape=jax.ShapeDtypeStruct((N, C_out, Gc_pad), jnp.float32),
        grid_spec=pltpu.PrefetchScalarGridSpec(
            num_scalar_prefetch=0,
            grid=(N // Nb,),
            in_specs=[
                pl.BlockSpec((Nb, C_in, Gin), lambda n: (n, 0, 0)),
                pl.BlockSpec((C_out, K * K * C_in), lambda n: (0, 0)),
                pl.BlockSpec((C_out, 1), lambda n: (0, 0)),
            ],
            out_specs=pl.BlockSpec((Nb, C_out, Gc_pad), lambda n: (n, 0, 0)),
            scratch_shapes=[pltpu.VMEM((K * K * C_in, Nb * Gc_pad), compute_dtype)],
        ),
        compiler_params=pltpu.CompilerParams(
            dimension_semantics=("parallel",)),
    )(x_flat, w2d, shift)

    # --- glue (output-sized, cheap): crop the flat padded-grid output --------------
    o = o_flat[:, :, :G_full].reshape(N, C_out, H, Wp)[:, :, :, :W]
    return o


def _reference(x, w, gamma, beta, running_mean, running_var, eps=1e-5):
    """Pure-JAX reference: conv3x3 (pad 1, no bias) + inference BN + ReLU."""
    y = jax.lax.conv_general_dilated(
        x, w, window_strides=(1, 1), padding=[(1, 1), (1, 1)],
        dimension_numbers=("NCHW", "OIHW", "NCHW"))
    scale = gamma / jnp.sqrt(running_var + eps)
    shift = beta - running_mean * scale
    y = y * scale.reshape(1, -1, 1, 1) + shift.reshape(1, -1, 1, 1)
    return jnp.maximum(y, 0.0)


if __name__ == "__main__":
    key = jax.random.PRNGKey(0)
    k_x, k_w, k_g, k_b, k_m, k_v = jax.random.split(key, 6)

    N, C_in, C_out, H, W, K = 2, 4, 8, 16, 16, 3
    x = jax.random.normal(k_x, (N, C_in, H, W), jnp.float32)
    fan = C_in * K * K
    w = jax.random.uniform(k_w, (C_out, C_in, K, K), jnp.float32,
                           minval=-1.0, maxval=1.0) / jnp.sqrt(fan)
    gamma = jax.random.uniform(k_g, (C_out,), jnp.float32, minval=0.5, maxval=1.5)
    beta = jax.random.uniform(k_b, (C_out,), jnp.float32, minval=-0.5, maxval=0.5)
    running_mean = 0.1 * jax.random.normal(k_m, (C_out,), jnp.float32)
    running_var = jax.random.uniform(k_v, (C_out,), jnp.float32, minval=0.5, maxval=1.5)

    ref = _reference(x, w, gamma, beta, running_mean, running_var)

    # f32 path: one image per grid step -> grid=(N,) "parallel" keeps both v7x TCs busy.
    out = normal_block(x, w, gamma, beta, running_mean, running_var,
                       compute_dtype=jnp.float32, images_per_step=1)
    out = jax.block_until_ready(out)
    assert out.shape == (N, C_out, H, W), out.shape
    assert jnp.allclose(out, ref, atol=1e-4, rtol=1e-4), "f32 mismatch vs reference"

    # bf16 MXU path (v6e/v7x): both images batched into one step (batch on lane axis).
    out_bf16 = normal_block(x, w, gamma, beta, running_mean, running_var,
                            compute_dtype=jnp.bfloat16, images_per_step=2)
    out_bf16 = jax.block_until_ready(out_bf16)
    assert jnp.allclose(out_bf16, ref, atol=3e-2, rtol=3e-2), "bf16 mismatch vs reference"

    print("KERNEL_OK")
</pallas_src>

<mosaic_0001>
module attributes {stable_mosaic.version = 11 : i64} {
  func.func @_conv_bn_relu_kernel(%arg0: i32, %arg1: memref<1x4x432xf32, #tpu.memory_space<vmem>>, %arg2: memref<8x36xf32, #tpu.memory_space<vmem>>, %arg3: memref<8x1xf32, #tpu.memory_space<vmem>>, %arg4: memref<1x8x384xf32, #tpu.memory_space<vmem>>, %arg5: memref<36x384xf32, #tpu.memory_space<vmem>>) attributes {dimension_semantics = [#tpu.dimension_semantics<parallel>], iteration_bounds = array<i64: 2>, scalar_prefetch = 0 : i64, scratch_operands = 1 : i64, tpu.core_type = #tpu.core_type<tc>, window_params = [{transform_indices = @transform_0, window_bounds = array<i64: 1, 4, 432>}, {pipeline_mode = #tpu.pipeline_mode<synchronous>, transform_indices = @transform_1, window_bounds = array<i64: 8, 36>}, {pipeline_mode = #tpu.pipeline_mode<synchronous>, transform_indices = @transform_2, window_bounds = array<i64: 8, 1>}, {transform_indices = @transform_3, window_bounds = array<i64: 1, 8, 384>}]} {
    %c0 = arith.constant 0 : index
    %c0_0 = arith.constant 0 : index
    %c0_1 = arith.constant 0 : index
    %0 = vector.load %arg1[%c0, %c0_0, %c0_1] : memref<1x4x432xf32, #tpu.memory_space<vmem>>, vector<1x4x432xf32>
    %1 = vector.shape_cast %0 : vector<1x4x432xf32> to vector<4x432xf32>
    %2 = vector.extract_strided_slice %1 {offsets = [0, 0], sizes = [4, 384], strides = [1, 1]} : vector<4x432xf32> to vector<4x384xf32>
    %c0_2 = arith.constant 0 : index
    %c0_3 = arith.constant 0 : index
    %3 = vector.load %arg5[%c0_2, %c0_3] : memref<36x384xf32, #tpu.memory_space<vmem>>, vector<4x384xf32>
    tpu.vector_store %arg5[%c0_2, %c0_3], %2 {strides = array<i32>} : memref<36x384xf32, #tpu.memory_space<vmem>>, vector<4x384xf32>,
    %4 = vector.extract_strided_slice %1 {offsets = [0, 1], sizes = [4, 384], strides = [1, 1]} : vector<4x432xf32> to vector<4x384xf32>
    %c4 = arith.constant 4 : index
    %c0_4 = arith.constant 0 : index
    %5 = vector.load %arg5[%c4, %c0_4] : memref<36x384xf32, #tpu.memory_space<vmem>>, vector<4x384xf32>
    tpu.vector_store %arg5[%c4, %c0_4], %4 {strides = array<i32>} : memref<36x384xf32, #tpu.memory_space<vmem>>, vector<4x384xf32>,
    %6 = vector.extract_strided_slice %1 {offsets = [0, 2], sizes = [4, 384], strides = [1, 1]} : vector<4x432xf32> to vector<4x384xf32>
    %c8 = arith.constant 8 : index
    %c0_5 = arith.constant 0 : index
    %7 = vector.load %arg5[%c8, %c0_5] : memref<36x384xf32, #tpu.memory_space<vmem>>, vector<4x384xf32>
    tpu.vector_store %arg5[%c8, %c0_5], %6 {strides = array<i32>} : memref<36x384xf32, #tpu.memory_space<vmem>>, vector<4x384xf32>,
    %8 = vector.extract_strided_slice %1 {offsets = [0, 18], sizes = [4, 384], strides = [1, 1]} : vector<4x432xf32> to vector<4x384xf32>
    %c12 = arith.constant 12 : index
    %c0_6 = arith.constant 0 : index
    %9 = vector.load %arg5[%c12, %c0_6] : memref<36x384xf32, #tpu.memory_space<vmem>>, vector<4x384xf32>
    tpu.vector_store %arg5[%c12, %c0_6], %8 {strides = array<i32>} : memref<36x384xf32, #tpu.memory_space<vmem>>, vector<4x384xf32>,
    %10 = vector.extract_strided_slice %1 {offsets = [0, 19], sizes = [4, 384], strides = [1, 1]} : vector<4x432xf32> to vector<4x384xf32>
    %c16 = arith.constant 16 : index
    %c0_7 = arith.constant 0 : index
    %11 = vector.load %arg5[%c16, %c0_7] : memref<36x384xf32, #tpu.memory_space<vmem>>, vector<4x384xf32>
    tpu.vector_store %arg5[%c16, %c0_7], %10 {strides = array<i32>} : memref<36x384xf32, #tpu.memory_space<vmem>>, vector<4x384xf32>,
    %12 = vector.extract_strided_slice %1 {offsets = [0, 20], sizes = [4, 384], strides = [1, 1]} : vector<4x432xf32> to vector<4x384xf32>
    %c20 = arith.constant 20 : index
    %c0_8 = arith.constant 0 : index
    %13 = vector.load %arg5[%c20, %c0_8] : memref<36x384xf32, #tpu.memory_space<vmem>>, vector<4x384xf32>
    tpu.vector_store %arg5[%c20, %c0_8], %12 {strides = array<i32>} : memref<36x384xf32, #tpu.memory_space<vmem>>, vector<4x384xf32>,
    %14 = vector.extract_strided_slice %1 {offsets = [0, 36], sizes = [4, 384], strides = [1, 1]} : vector<4x432xf32> to vector<4x384xf32>
    %c24 = arith.constant 24 : index
    %c0_9 = arith.constant 0 : index
    %15 = vector.load %arg5[%c24, %c0_9] : memref<36x384xf32, #tpu.memory_space<vmem>>, vector<4x384xf32>
    tpu.vector_store %arg5[%c24, %c0_9], %14 {strides = array<i32>} : memref<36x384xf32, #tpu.memory_space<vmem>>, vector<4x384xf32>,
    %16 = vector.extract_strided_slice %1 {offsets = [0, 37], sizes = [4, 384], strides = [1, 1]} : vector<4x432xf32> to vector<4x384xf32>
    %c28 = arith.constant 28 : index
    %c0_10 = arith.constant 0 : index
    %17 = vector.load %arg5[%c28, %c0_10] : memref<36x384xf32, #tpu.memory_space<vmem>>, vector<4x384xf32>
    tpu.vector_store %arg5[%c28, %c0_10], %16 {strides = array<i32>} : memref<36x384xf32, #tpu.memory_space<vmem>>, vector<4x384xf32>,
    %18 = vector.extract_strided_slice %1 {offsets = [0, 38], sizes = [4, 384], strides = [1, 1]} : vector<4x432xf32> to vector<4x384xf32>
    %c32 = arith.constant 32 : index
    %c0_11 = arith.constant 0 : index
    %19 = vector.load %arg5[%c32, %c0_11] : memref<36x384xf32, #tpu.memory_space<vmem>>, vector<4x384xf32>
    tpu.vector_store %arg5[%c32, %c0_11], %18 {strides = array<i32>} : memref<36x384xf32, #tpu.memory_space<vmem>>, vector<4x384xf32>,
    %c0_12 = arith.constant 0 : index
    %c0_13 = arith.constant 0 : index
    %20 = vector.load %arg2[%c0_12, %c0_13] : memref<8x36xf32, #tpu.memory_space<vmem>>, vector<8x36xf32>
    %c0_14 = arith.constant 0 : index
    %c0_15 = arith.constant 0 : index
    %21 = vector.load %arg5[%c0_14, %c0_15] : memref<36x384xf32, #tpu.memory_space<vmem>>, vector<36x384xf32>
    %cst = arith.constant dense<0.000000e+00> : vector<8x384xf32>
    %22 = tpu.matmul %20, %21, %cst {dimension_numbers = #tpu.dot_dimension_numbers<[1], [0], [0], [1], [0, 0, 1, 1], [], []>} : vector<8x36xf32>, vector<36x384xf32>, vector<8x384xf32> -> vector<8x384xf32>
    %c0_16 = arith.constant 0 : index
    %c0_17 = arith.constant 0 : index
    %23 = vector.load %arg3[%c0_16, %c0_17] : memref<8x1xf32, #tpu.memory_space<vmem>>, vector<8x1xf32>
    %24 = vector.broadcast %23 : vector<8x1xf32> to vector<8x384xf32>
    %25 = arith.addf %22, %24 : vector<8x384xf32>
    %cst_18 = arith.constant 0.000000e+00 : f32
    %26 = vector.broadcast %cst_18 : f32 to vector<8x384xf32>
    %27 = arith.maximumf %25, %26 : vector<8x384xf32>
    %c0_19 = arith.constant 0 : index
    %c0_20 = arith.constant 0 : index
    %c0_21 = arith.constant 0 : index
    %28 = vector.load %arg4[%c0_19, %c0_20, %c0_21] : memref<1x8x384xf32, #tpu.memory_space<vmem>>, vector<1x8x384xf32>
    %29 = vector.shape_cast %28 : vector<1x8x384xf32> to vector<8x384xf32>
    %30 = vector.shape_cast %27 : vector<8x384xf32> to vector<1x8x384xf32>
    tpu.vector_store %arg4[%c0_19, %c0_20, %c0_21], %30 {strides = array<i32>} : memref<1x8x384xf32, #tpu.memory_space<vmem>>, vector<1x8x384xf32>,
    return
  }
  func.func @transform_0(%arg0: i32) -> (i32, i32, i32) {
    %c0_i32 = arith.constant 0 : i32
    %c0_i32_0 = arith.constant 0 : i32
    %c0_i32_1 = arith.constant 0 : i32
    return %arg0, %c0_i32, %c0_i32_0 : i32, i32, i32
  }
  func.func @transform_1(%arg0: i32) -> (i32, i32) {
    %c0_i32 = arith.constant 0 : i32
    %c0_i32_0 = arith.constant 0 : i32
    %c0_i32_1 = arith.constant 0 : i32
    return %c0_i32, %c0_i32_0 : i32, i32
  }
  func.func @transform_2(%arg0: i32) -> (i32, i32) {
    %c0_i32 = arith.constant 0 : i32
    %c0_i32_0 = arith.constant 0 : i32
    %c0_i32_1 = arith.constant 0 : i32
    return %c0_i32, %c0_i32_0 : i32, i32
  }
  func.func @transform_3(%arg0: i32) -> (i32, i32, i32) {
    %c0_i32 = arith.constant 0 : i32
    %c0_i32_0 = arith.constant 0 : i32
    %c0_i32_1 = arith.constant 0 : i32
    return %arg0, %c0_i32, %c0_i32_0 : i32, i32, i32
  }
}

</mosaic_0001>

<llo_original>
// kernel: normal_block.1
$region0: #{normal_block.1}
  #allocation0 [shape = 'u32[]', space=smem, size = 0x4, offset = 0x4, fixed_abs, tag = 'smem constant byte address 0x4 - core index']
  #allocation1 [shape = 'u32[72,128]{1,0:T(1,128)}', space=vmem, size = 0x9000, scoped, tag = 'internal scratch']
  #allocation2 [shape = 'f32[36,384]{1,0:T(8,128)}', space=vmem, size = 0xf000, scoped, tag = 'scratch operand']
  %s0 = inlined_call_operand.vmem [shape: f32[2,4,432], index: 0, kind: input, shape index: {}]
  %s1 = inlined_call_operand.vmem [shape: f32[8,36], index: 1, kind: input, shape index: {}]
  %s2 = inlined_call_operand.vmem [shape: f32[8,1], index: 2, kind: input, shape index: {}]
  %s3 = inlined_call_operand.vmem [shape: f32[2,8,384], index: 3, kind: output, shape index: {}]
  %s4 = sld [smem:[#allocation0]]
  $region45: #{normal_block.1} parent=0
    _
  %s6 = ssub.s32 1, %s4
  %s7 = scalar_select 0, %s6, %s4
  loop: start=0, step=1, limit=4
  $region2: #{normal_block.1} parent=0 // loop_pre_header
    _
  $region3: #{normal_block.1} parent=0 // loop_header
    %s9 = sphi 0, %s13
    %p10 = scmp.ge.s32.totalorder %s9, 4
    %s19 = sphi 0, %s21
    %s22 = sphi 0, %s19
    %s23 = sphi 0, %s22
    %s39 = sphi 0, %s23
    %s43 = sphi 0, %s43
    %s45 = sphi 0, %s43
    %s46 = sphi 0, %s45
    %s60 = sphi 0, %s46
    %s64 = sphi 0, %s64
    %s66 = sphi 0, %s64
    %s67 = sphi 0, %s66
    %s81 = sphi 0, %s67
    %s87 = sphi 0, %s89
    %s90 = sphi 0, %s87
    %s91 = sphi 0, %s90
    %s107 = sphi 0, %s91
  $region4: #{normal_block.1} parent=0 // loop_header_branch
    %12 = sbr.rel (%p10) target = $region8
  $region5: #{normal_block.1} parent=0 // loop_body
    %s14 = ssub.s32 %s9, 1
    %s15 = ssub.s32 %s9, 2
    %s16 = sadd.s32 %s9, 1
    %s17 = ssub.s32 %s9, %s16
    %p18 = scmp.eq.s32.totalorder %s17, 0
    %s20 = sadd.s32 %s19, 1
    %s21 = scalar_select %p18, %s19, %s20
    %p24 = pneg %p18
    %p25 = scmp.eq.s32.totalorder %s9, 1
    %p26 = por %p24, %p25
    %p27 = scmp.ne.s32.totalorder %s19, %s22
    %p28 = scmp.eq.s32.totalorder %s9, 0
    %p29 = por %p27, %p28
    %p30 = scmp.ne.s32.totalorder %s19, %s22
    %p31 = scmp.eq.s32.totalorder %s14, 1
    %p32 = por %p30, %p31
    %p33 = scmp.ne.s32.totalorder %s22, %s23
    %p34 = scmp.eq.s32.totalorder %s14, 0
    %p35 = por %p33, %p34
    %p36 = scmp.ne.s32.totalorder %s22, %s23
    %p37 = scmp.eq.s32.totalorder %s15, 1
    %p38 = por %p36, %p37
    %p40 = scmp.ne.s32.totalorder %s23, %s39
    %p41 = scmp.eq.s32.totalorder %s15, 0
    %p42 = por %p40, %p41
    %s44 = sadd.s32 %s43, 1
    %p47 = scmp.eq.s32.totalorder %s9, 1
    %p48 = scmp.ne.s32.totalorder %s43, %s45
    %p49 = scmp.eq.s32.totalorder %s9, 0
    %p50 = por %p48, %p49
    %p51 = scmp.ne.s32.totalorder %s43, %s45
    %p52 = scmp.eq.s32.totalorder %s14, 1
    %p53 = por %p51, %p52
    %p54 = scmp.ne.s32.totalorder %s45, %s46
    %p55 = scmp.eq.s32.totalorder %s14, 0
    %p56 = por %p54, %p55
    %p57 = scmp.ne.s32.totalorder %s45, %s46
    %p58 = scmp.eq.s32.totalorder %s15, 1
    %p59 = por %p57, %p58
    %p61 = scmp.ne.s32.totalorder %s46, %s60
    %p62 = scmp.eq.s32.totalorder %s15, 0
    %p63 = por %p61, %p62
    %s65 = sadd.s32 %s64, 1
    %p68 = scmp.eq.s32.totalorder %s9, 1
    %p69 = scmp.ne.s32.totalorder %s64, %s66
    %p70 = scmp.eq.s32.totalorder %s9, 0
    %p71 = por %p69, %p70
    %p72 = scmp.ne.s32.totalorder %s64, %s66
    %p73 = scmp.eq.s32.totalorder %s14, 1
    %p74 = por %p72, %p73
    %p75 = scmp.ne.s32.totalorder %s66, %s67
    %p76 = scmp.eq.s32.totalorder %s14, 0
    %p77 = por %p75, %p76
    %p78 = scmp.ne.s32.totalorder %s66, %s67
    %p79 = scmp.eq.s32.totalorder %s15, 1
    %p80 = por %p78, %p79
    %p82 = scmp.ne.s32.totalorder %s67, %s81
    %p83 = scmp.eq.s32.totalorder %s15, 0
    %p84 = por %p82, %p83
    %s85 = ssub.s32 %s9, %s16
    %p86 = scmp.eq.s32.totalorder %s85, 0
    %s88 = sadd.s32 %s87, 1
    %s89 = scalar_select %p86, %s87, %s88
    %p92 = pneg %p86
    %p93 = scmp.eq.s32.totalorder %s9, 1
    %p94 = por %p92, %p93
    %p95 = scmp.ne.s32.totalorder %s87, %s90
    %p96 = scmp.eq.s32.totalorder %s9, 0
    %p97 = por %p95, %p96
    %p98 = scmp.ne.s32.totalorder %s87, %s90
    %p99 = scmp.eq.s32.totalorder %s14, 1
    %p100 = por %p98, %p99
    %p101 = scmp.ne.s32.totalorder %s90, %s91
    %p102 = scmp.eq.s32.totalorder %s14, 0
    %p103 = por %p101, %p102
    %p104 = scmp.ne.s32.totalorder %s90, %s91
    %p105 = scmp.eq.s32.totalorder %s15, 1
    %p106 = por %p104, %p105
    %p108 = scmp.ne.s32.totalorder %s91, %s107
    %p109 = scmp.eq.s32.totalorder %s15, 0
    %p110 = por %p108, %p109
    %p111 = scmp.le.s32.totalorder 1, %s9
    %p112 = scmp.lt.s32.totalorder %s9, 3
    %p113 = pnand %p111, %p112
    %p114 = pneg %p113
    // Predicated region
    $region9: #{normal_block.1} parent=5 // pred_check
      _
    $region10: #{normal_block.1} parent=5 // pred_check_branch
      %116 = sbr.rel (%p113) target = $region12
    $region11: #{normal_block.1} parent=5 // pred_region
      %s117 = ssub.s32 %s9, 1
      // Predicated region
      $region13: #{normal_block.1} parent=11 // pred_check
        %p118 = pneg %p56
      $region14: #{normal_block.1} parent=11 // pred_check_branch
        %120 = sbr.rel (%p118) target = $region16
      $region15: #{normal_block.1} parent=11 // pred_region
        _
      $region16: #{normal_block.1} parent=11 // pred_fallthru
        _
      // Predicated region
      $region17: #{normal_block.1} parent=11 // pred_check
        %p121 = pneg %p77
      $region18: #{normal_block.1} parent=11 // pred_check_branch
        %123 = sbr.rel (%p121) target = $region20
      $region19: #{normal_block.1} parent=11 // pred_region
        _
      $region20: #{normal_block.1} parent=11 // pred_fallthru
        _
    $region12: #{normal_block.1} parent=5 // pred_fallthru
      _
    %p124 = scmp.lt.s32.totalorder %s9, 2
    // Predicated region
    $region21: #{normal_block.1} parent=5 // pred_check
      %p125 = pneg %p124
    $region22: #{normal_block.1} parent=5 // pred_check_branch
      %127 = sbr.rel (%p125) target = $region24
    $region23: #{normal_block.1} parent=5 // pred_region
      // Predicated region
      $region25: #{normal_block.1} parent=23 // pred_check
        %p128 = pneg %p29
      $region26: #{normal_block.1} parent=23 // pred_check_branch
        %130 = sbr.rel (%p128) target = $region28
      $region27: #{normal_block.1} parent=23 // pred_region
        %p131 = scmp.lt.s32.totalorder %s9, 1
        %s132 = scalar_select %p131, %s9, 1
        %s133 = smul.addr %s132, 4
        %s134 = smul.addr %s133, 4
        %s135 = scalar_lea.vmem %s0, %s134
      $region28: #{normal_block.1} parent=23 // pred_fallthru
        _
    $region24: #{normal_block.1} parent=5 // pred_fallthru
      _
    %p136 = scmp.le.s32.totalorder 1, %s9
    %p137 = scmp.lt.s32.totalorder %s9, 3
    %p138 = pnand %p136, %p137
    %p139 = pneg %p138
    // Predicated region
    $region29: #{normal_block.1} parent=5 // pred_check
      _
    $region30: #{normal_block.1} parent=5 // pred_check_branch
      %141 = sbr.rel (%p138) target = $region32
    $region31: #{normal_block.1} parent=5 // pred_region
      %s142 = ssub.s32 %s9, 1
      %p143 = scmp.lt.s32.totalorder %s14, 1
      %s144 = scalar_select %p143, %s14, 1
      %s145 = smul.addr %s144, 4
      %s146 = smul.addr %s145, 4
      %s147 = scalar_lea.vmem %s0, %s146
      %p148 = pneg %p35
      %p149 = pneg %p32
      %p150 = pneg %p56
      %p151 = pneg %p53
      %p152 = pneg %p77
      %p153 = pneg %p74
      %p154 = pneg %p103
      %p155 = pneg %p100
      %p156 = scmp.lt.s32.totalorder %s14, 1
      %s157 = scalar_select %p156, %s14, 1
      %s158 = smul.addr %s157, 3
      %s159 = smul.addr %s158, 8
      %s160 = scalar_lea.vmem %s3, %s159
      %p161 = scmp.lt.s32.totalorder %s14, 1
      %s162 = scalar_select %p161, %s14, 1
      %s163 = smul.addr %s162, 4
      %s164 = smul.addr %s163, 4
      %s165 = scalar_lea.vmem %s0, %s164
      %p166 = scmp.lt.s32.totalorder %s14, 1
      %s167 = scalar_select %p166, %s14, 1
      %s168 = smul.addr %s167, 3
      %s169 = smul.addr %s168, 8
      %s170 = scalar_lea.vmem %s3, %s169
      %v171 = vld [vmem:[%s165] sm:$0xff]
      %v172 = vld [vmem:[%s165 + $0x8] sm:$0xff]
      %175 = vst [vmem:[#allocation1] ss:$2 sm:$0xff] %v171
      %s176 = scalar_lea.vmem [#allocation1], 16
      %177 = vst [vmem:[%s176] ss:$2 sm:$0xff] %v172
      %v178 = vld.sshfl [vmem:[#allocation1] sm:$0xff pattern:$0x75316420]
      %v179 = vld.sshfl [vmem:[#allocation1 + $0x8] sm:$0xff pattern:$0x75316420]
      %v180 = vld.sshfl [vmem:[#allocation1 + $0x10] sm:$0xff pattern:$0x75316420]
      %184 = vst [vmem:[#allocation2] sm:$0xf] %v178
      %185 = vst [vmem:[#allocation2 + $0x8] sm:$0xf] %v179
      %186 = vst [vmem:[#allocation2 + $0x10] sm:$0xf] %v180
      %s187 = scalar_lea.vmem [#allocation1], 1
      %188 = vst [vmem:[%s187] ss:$2 sm:$0xff] %v171
      %s189 = scalar_lea.vmem [#allocation1], 17
      %190 = vst [vmem:[%s189] ss:$2 sm:$0xff] %v172
      %v191 = vld.sshfl [vmem:[#allocation1] sm:$0xff pattern:$0x75316420]
      %v192 = vld.sshfl [vmem:[#allocation1 + $0x8] sm:$0xff pattern:$0x75316420]
      %v193 = vld.sshfl [vmem:[#allocation1 + $0x10] sm:$0xff pattern:$0x75316420]
      %v194 = vld.sshfl [vmem:[#allocation1 + $0x18] sm:$0xff pattern:$0x75316420]
      %195 = vrot.lane.b32.xlu0 %v191, 127
      %v196 = vpop.permute.xlu0 %195
      %197 = vrot.lane.b32.xlu0 %v192, 127
      %v198 = vpop.permute.xlu0 %197
      %199 = vrot.lane.b32.xlu0 %v193, 127
      %v200 = vpop.permute.xlu0 %199
      %201 = vrot.lane.b32.xlu0 %v194, 127
      %v202 = vpop.permute.xlu0 %201
      %vm203 = vcmask 1039360
      %v204 = vsel %vm203, %v196, %v198
      %v205 = vsel %vm203, %v198, %v200
      %v206 = vsel %vm203, %v200, %v202
      %210 = vst [vmem:[#allocation2] sm:$0xf0] %v204
      %211 = vst [vmem:[#allocation2 + $0x8] sm:$0xf0] %v205
      %212 = vst [vmem:[#allocation2 + $0x10] sm:$0xf0] %v206
      %213 = vst [vmem:[#allocation1] ss:$2 sm:$0xff] %v171
      %s214 = scalar_lea.vmem [#allocation1], 16
      %215 = vst [vmem:[%s214] ss:$2 sm:$0xff] %v172
      %v216 = vld.sshfl [vmem:[#allocation1] sm:$0xff pattern:$0x75316420]
      %v217 = vld.sshfl [vmem:[#allocation1 + $0x8] sm:$0xff pattern:$0x75316420]
      %v218 = vld.sshfl [vmem:[#allocation1 + $0x10] sm:$0xff pattern:$0x75316420]
      %v219 = vld.sshfl [vmem:[#allocation1 + $0x18] sm:$0xff pattern:$0x75316420]
      %220 = vrot.lane.b32.xlu0 %v216, 126
      %v221 = vpop.permute.xlu0 %220
      %222 = vrot.lane.b32.xlu0 %v217, 126
      %v223 = vpop.permute.xlu0 %222
      %224 = vrot.lane.b32.xlu0 %v218, 126
      %v225 = vpop.permute.xlu0 %224
      %226 = vrot.lane.b32.xlu0 %v219, 126
      %v227 = vpop.permute.xlu0 %226
      %vm228 = vcmask 1031168
      %v229 = vsel %vm228, %v221, %v223
      %v230 = vsel %vm228, %v223, %v225
      %v231 = vsel %vm228, %v225, %v227
      %235 = vst [vmem:[#allocation2 + $0x18] sm:$0xf] %v229
      %236 = vst [vmem:[#allocation2 + $0x20] sm:$0xf] %v230
      %237 = vst [vmem:[#allocation2 + $0x28] sm:$0xf] %v231
      %s238 = scalar_lea.vmem [#allocation1], 1
      %239 = vst [vmem:[%s238] ss:$2 sm:$0xff] %v171
      %s240 = scalar_lea.vmem [#allocation1], 17
      %241 = vst [vmem:[%s240] ss:$2 sm:$0xff] %v172
      %v242 = vld.sshfl [vmem:[#allocation1] sm:$0xff pattern:$0x75316420]
      %v243 = vld.sshfl [vmem:[#allocation1 + $0x8] sm:$0xff pattern:$0x75316420]
      %v244 = vld.sshfl [vmem:[#allocation1 + $0x10] sm:$0xff pattern:$0x75316420]
      %v245 = vld.sshfl [vmem:[#allocation1 + $0x18] sm:$0xff pattern:$0x75316420]
      %246 = vrot.lane.b32.xlu0 %v242, 110
      %v247 = vpop.permute.xlu0 %246
      %248 = vrot.lane.b32.xlu0 %v243, 110
      %v249 = vpop.permute.xlu0 %248
      %250 = vrot.lane.b32.xlu0 %v244, 110
      %v251 = vpop.permute.xlu0 %250
      %252 = vrot.lane.b32.xlu0 %v245, 110
      %v253 = vpop.permute.xlu0 %252
      %vm254 = vcmask 900096
      %v255 = vsel %vm254, %v247, %v249
      %v256 = vsel %vm254, %v249, %v251
      %v257 = vsel %vm254, %v251, %v253
      %261 = vst [vmem:[#allocation2 + $0x18] sm:$0xf0] %v255
      %262 = vst [vmem:[#allocation2 + $0x20] sm:$0xf0] %v256
      %263 = vst [vmem:[#allocation2 + $0x28] sm:$0xf0] %v257
      %264 = vst [vmem:[#allocation1] ss:$2 sm:$0xff] %v171
      %s265 = scalar_lea.vmem [#allocation1], 16
      %266 = vst [vmem:[%s265] ss:$2 sm:$0xff] %v172
      %v267 = vld.sshfl [vmem:[#allocation1] sm:$0xff pattern:$0x75316420]
      %v268 = vld.sshfl [vmem:[#allocation1 + $0x8] sm:$0xff pattern:$0x75316420]
      %v269 = vld.sshfl [vmem:[#allocation1 + $0x10] sm:$0xff pattern:$0x75316420]
      %v270 = vld.sshfl [vmem:[#allocation1 + $0x18] sm:$0xff pattern:$0x75316420]
      %271 = vrot.lane.b32.xlu0 %v267, 109
      %v272 = vpop.permute.xlu0 %271
      %273 = vrot.lane.b32.xlu0 %v268, 109
      %v274 = vpop.permute.xlu0 %273
      %275 = vrot.lane.b32.xlu0 %v269, 109
      %v276 = vpop.permute.xlu0 %275
      %277 = vrot.lane.b32.xlu0 %v270, 109
      %v278 = vpop.permute.xlu0 %277
      %vm279 = vcmask 891904
      %v280 = vsel %vm279, %v272, %v274
      %v281 = vsel %vm279, %v274, %v276
      %v282 = vsel %vm279, %v276, %v278
      %286 = vst [vmem:[#allocation2 + $0x30] sm:$0xf] %v280
      %287 = vst [vmem:[#allocation2 + $0x38] sm:$0xf] %v281
      %288 = vst [vmem:[#allocation2 + $0x40] sm:$0xf] %v282
      %s289 = scalar_lea.vmem [#allocation1], 1
      %290 = vst [vmem:[%s289] ss:$2 sm:$0xff] %v171
      %s291 = scalar_lea.vmem [#allocation1], 17
      %292 = vst [vmem:[%s291] ss:$2 sm:$0xff] %v172
      %v293 = vld.sshfl [vmem:[#allocation1] sm:$0xff pattern:$0x75316420]
      %v294 = vld.sshfl [vmem:[#allocation1 + $0x8] sm:$0xff pattern:$0x75316420]
      %v295 = vld.sshfl [vmem:[#allocation1 + $0x10] sm:$0xff pattern:$0x75316420]
      %v296 = vld.sshfl [vmem:[#allocation1 + $0x18] sm:$0xff pattern:$0x75316420]
      %297 = vrot.lane.b32.xlu0 %v293, 108
      %v298 = vpop.permute.xlu0 %297
      %299 = vrot.lane.b32.xlu0 %v294, 108
      %v300 = vpop.permute.xlu0 %299
      %301 = vrot.lane.b32.xlu0 %v295, 108
      %v302 = vpop.permute.xlu0 %301
      %303 = vrot.lane.b32.xlu0 %v296, 108
      %v304 = vpop.permute.xlu0 %303
      %vm305 = vcmask 883712
      %v306 = vsel %vm305, %v298, %v300
      %v307 = vsel %vm305, %v300, %v302
      %v308 = vsel %vm305, %v302, %v304
      %312 = vst [vmem:[#allocation2 + $0x30] sm:$0xf0] %v306
      %313 = vst [vmem:[#allocation2 + $0x38] sm:$0xf0] %v307
      %314 = vst [vmem:[#allocation2 + $0x40] sm:$0xf0] %v308
      %315 = vst [vmem:[#allocation1] ss:$2 sm:$0xff] %v171
      %s316 = scalar_lea.vmem [#allocation1], 16
      %317 = vst [vmem:[%s316] ss:$2 sm:$0xff] %v172
      %v318 = vld.sshfl [vmem:[#allocation1] sm:$0xff pattern:$0x75316420]
      %v319 = vld.sshfl [vmem:[#allocation1 + $0x8] sm:$0xff pattern:$0x75316420]
      %v320 = vld.sshfl [vmem:[#allocation1 + $0x10] sm:$0xff pattern:$0x75316420]
      %v321 = vld.sshfl [vmem:[#allocation1 + $0x18] sm:$0xff pattern:$0x75316420]
      %322 = vrot.lane.b32.xlu0 %v318, 92
      %v323 = vpop.permute.xlu0 %322
      %324 = vrot.lane.b32.xlu0 %v319, 92
      %v325 = vpop.permute.xlu0 %324
      %326 = vrot.lane.b32.xlu0 %v320, 92
      %v327 = vpop.permute.xlu0 %326
      %328 = vrot.lane.b32.xlu0 %v321, 92
      %v329 = vpop.permute.xlu0 %328
      %vm330 = vcmask 752640
      %v331 = vsel %vm330, %v323, %v325
      %v332 = vsel %vm330, %v325, %v327
      %v333 = vsel %vm330, %v327, %v329
      %337 = vst [vmem:[#allocation2 + $0x48] sm:$0xf] %v331
      %338 = vst [vmem:[#allocation2 + $0x50] sm:$0xf] %v332
      %339 = vst [vmem:[#allocation2 + $0x58] sm:$0xf] %v333
      %s340 = scalar_lea.vmem [#allocation1], 1
      %341 = vst [vmem:[%s340] ss:$2 sm:$0xff] %v171
      %s342 = scalar_lea.vmem [#allocation1], 17
      %343 = vst [vmem:[%s342] ss:$2 sm:$0xff] %v172
      %v344 = vld.sshfl [vmem:[#allocation1] sm:$0xff pattern:$0x75316420]
      %v345 = vld.sshfl [vmem:[#allocation1 + $0x8] sm:$0xff pattern:$0x75316420]
      %v346 = vld.sshfl [vmem:[#allocation1 + $0x10] sm:$0xff pattern:$0x75316420]
      %v347 = vld.sshfl [vmem:[#allocation1 + $0x18] sm:$0xff pattern:$0x75316420]
      %348 = vrot.lane.b32.xlu0 %v344, 91
      %v349 = vpop.permute.xlu0 %348
      %350 = vrot.lane.b32.xlu0 %v345, 91
      %v351 = vpop.permute.xlu0 %350
      %352 = vrot.lane.b32.xlu0 %v346, 91
      %v353 = vpop.permute.xlu0 %352
      %354 = vrot.lane.b32.xlu0 %v347, 91
      %v355 = vpop.permute.xlu0 %354
      %vm356 = vcmask 744448
      %v357 = vsel %vm356, %v349, %v351
      %v358 = vsel %vm356, %v351, %v353
      %v359 = vsel %vm356, %v353, %v355
      %363 = vst [vmem:[#allocation2 + $0x48] sm:$0xf0] %v357
      %364 = vst [vmem:[#allocation2 + $0x50] sm:$0xf0] %v358
      %365 = vst [vmem:[#allocation2 + $0x58] sm:$0xf0] %v359
      %366 = vst [vmem:[#allocation1] ss:$2 sm:$0xff] %v171
      %s367 = scalar_lea.vmem [#allocation1], 16
      %368 = vst [vmem:[%s367] ss:$2 sm:$0xff] %v172
      %v369 = vld.sshfl [vmem:[#allocation1] sm:$0xff pattern:$0x75316420]
      %v370 = vld.sshfl [vmem:[#allocation1 + $0x8] sm:$0xff pattern:$0x75316420]
      %v371 = vld.sshfl [vmem:[#allocation1 + $0x10] sm:$0xff pattern:$0x75316420]
      %v372 = vld.sshfl [vmem:[#allocation1 + $0x18] sm:$0xff pattern:$0x75316420]
      %373 = vrot.lane.b32.xlu0 %v369, 90
      %v374 = vpop.permute.xlu0 %373
      %375 = vrot.lane.b32.xlu0 %v370, 90
      %v376 = vpop.permute.xlu0 %375
      %377 = vrot.lane.b32.xlu0 %v371, 90
      %v378 = vpop.permute.xlu0 %377
      %379 = vrot.lane.b32.xlu0 %v372, 90
      %v380 = vpop.permute.xlu0 %379
      %vm381 = vcmask 736256
      %v382 = vsel %vm381, %v374, %v376
      %v383 = vsel %vm381, %v376, %v378
      %v384 = vsel %vm381, %v378, %v380
      %388 = vst [vmem:[#allocation2 + $0x60] sm:$0xf] %v382
      %389 = vst [vmem:[#allocation2 + $0x68] sm:$0xf] %v383
      %390 = vst [vmem:[#allocation2 + $0x70] sm:$0xf] %v384
      %v391 = vld [vmem:[%s1] sm:$0xff]
      %v392 = vld [vmem:[#allocation2] sm:$0xff]
      %v393 = vld [vmem:[#allocation2 + $0x8] sm:$0xff]
      %v394 = vld [vmem:[#allocation2 + $0x10] sm:$0xff]
      %v395 = vld [vmem:[#allocation2 + $0x18] sm:$0xff]
      %v396 = vld [vmem:[#allocation2 + $0x20] sm:$0xff]
      %v397 = vld [vmem:[#allocation2 + $0x28] sm:$0xff]
      %v398 = vld [vmem:[#allocation2 + $0x30] sm:$0xff]
      %v399 = vld [vmem:[#allocation2 + $0x38] sm:$0xff]
      %v400 = vld [vmem:[#allocation2 + $0x40] sm:$0xff]
      %v401 = vld [vmem:[#allocation2 + $0x48] sm:$0xff]
      %v402 = vld [vmem:[#allocation2 + $0x50] sm:$0xff]
      %v403 = vld [vmem:[#allocation2 + $0x58] sm:$0xff]
      %v404 = vld [vmem:[#allocation2 + $0x60] sm:$0xf]
      %v405 = vld [vmem:[#allocation2 + $0x68] sm:$0xf]
      %v406 = vld [vmem:[#allocation2 + $0x70] sm:$0xf]
      %v407 = vld [vmem:[%s2] sm:$0xff]
      %409 = vset.pattern.permute.xlu0 0
      %410 = vperm.xlu0 %409, %v407
      %v411 = vpop.permute.xlu0 %410
      %vm413 = vcmask 293888
      %v415 = vsel %vm413, %v391, 0
      %vm417 = vcmask 1043456
      %v419 = vsel %vm417, %v404, 0
      %v422 = vsel %vm417, %v405, 0
      %v425 = vsel %vm417, %v406, 0
      %427 = vmatpush.msra.mxu0 0.0
      %428 = vmatpush.msra.mxu0 0.0
      %429 = vmatpush.msra.mxu0 0.0
      %430 = vmatpush.msra.mxu0 0.0
      %431 = vmatpush.msra.mxu0 0.0
      %432 = vmatpush.msra.mxu0 0.0
      %433 = vmatpush.msra.mxu0 0.0
      %434 = vmatpush.msra.mxu0 0.0
      %435 = vmatpush.msra.mxu0 0.0
      %436 = vmatpush.msra.mxu0 0.0
      %437 = vmatpush.msra.mxu0 0.0
      %438 = vmatpush.msra.mxu0 %v419
      %439 = vmatpush.msra.mxu0 %v401
      %440 = vmatpush.msra.mxu0 %v398
      %441 = vmatpush.msra.mxu0 %v395
      %442 = vmatpush.msra.mxu0 %v392
      %443 = vmatmul.f32.gmra.mxu0 %v415
      %v444 = vpop.f32.mrf.mxu0
      %v445 = vadd.f32 %v411, %v444
      %446 = vdwg.mxu0
      %447 = vmatpush.msra.mxu0 0.0
      %448 = vmatpush.msra.mxu0 0.0
      %449 = vmatpush.msra.mxu0 0.0
      %450 = vmatpush.msra.mxu0 0.0
      %451 = vmatpush.msra.mxu0 0.0
      %452 = vmatpush.msra.mxu0 0.0
      %453 = vmatpush.msra.mxu0 0.0
      %454 = vmatpush.msra.mxu0 0.0
      %455 = vmatpush.msra.mxu0 0.0
      %456 = vmatpush.msra.mxu0 0.0
      %457 = vmatpush.msra.mxu0 0.0
      %458 = vmatpush.msra.mxu0 %v422
      %459 = vmatpush.msra.mxu0 %v402
      %460 = vmatpush.msra.mxu0 %v399
      %461 = vmatpush.msra.mxu0 %v396
      %462 = vmatpush.msra.mxu0 %v393
      %463 = vmatmul.f32.gmra.mxu0 %v415
      %v464 = vpop.f32.mrf.mxu0
      %v465 = vadd.f32 %v411, %v464
      %466 = vdwg.mxu0
      %467 = vmatpush.msra.mxu0 0.0
      %468 = vmatpush.msra.mxu0 0.0
      %469 = vmatpush.msra.mxu0 0.0
      %470 = vmatpush.msra.mxu0 0.0
      %471 = vmatpush.msra.mxu0 0.0
      %472 = vmatpush.msra.mxu0 0.0
      %473 = vmatpush.msra.mxu0 0.0
      %474 = vmatpush.msra.mxu0 0.0
      %475 = vmatpush.msra.mxu0 0.0
      %476 = vmatpush.msra.mxu0 0.0
      %477 = vmatpush.msra.mxu0 0.0
      %478 = vmatpush.msra.mxu0 %v425
      %479 = vmatpush.msra.mxu0 %v403
      %480 = vmatpush.msra.mxu0 %v400
      %481 = vmatpush.msra.mxu0 %v397
      %482 = vmatpush.msra.mxu0 %v394
      %483 = vmatmul.f32.gmra.mxu0 %v415
      %v484 = vpop.f32.mrf.mxu0
      %v485 = vadd.f32 %v411, %v484
      %486 = vdwg.mxu0
      %v487 = vmax.f32 %v445, 0.0
      %v488 = vmax.f32 %v465, 0.0
      %v489 = vmax.f32 %v485, 0.0
      %490 = vst [vmem:[%s170] sm:$0xff] %v487
      %491 = vst [vmem:[%s170 + $0x8] sm:$0xff] %v488
      %492 = vst [vmem:[%s170 + $0x10] sm:$0xff] %v489
      %p493 = scmp.lt.s32.totalorder %s14, 1
      %s494 = scalar_select %p493, %s14, 1
      %s495 = smul.addr %s494, 3
      %s496 = smul.addr %s495, 8
      %s497 = scalar_lea.vmem %s3, %s496
      // Predicated region
      $region33: #{normal_block.1} parent=31 // pred_check
        %p498 = pneg %p100
      $region34: #{normal_block.1} parent=31 // pred_check_branch
        %500 = sbr.rel (%p498) target = $region36
      $region35: #{normal_block.1} parent=31 // pred_region
        _
      $region36: #{normal_block.1} parent=31 // pred_fallthru
        _
    $region32: #{normal_block.1} parent=5 // pred_fallthru
      _
    %p501 = scmp.le.s32.totalorder 2, %s9
    // Predicated region
    $region37: #{normal_block.1} parent=5 // pred_check
      %p502 = pneg %p501
    $region38: #{normal_block.1} parent=5 // pred_check_branch
      %504 = sbr.rel (%p502) target = $region40
    $region39: #{normal_block.1} parent=5 // pred_region
      %s505 = ssub.s32 %s9, 2
      // Predicated region
      $region41: #{normal_block.1} parent=39 // pred_check
        %p506 = pneg %p106
      $region42: #{normal_block.1} parent=39 // pred_check_branch
        %508 = sbr.rel (%p506) target = $region44
      $region43: #{normal_block.1} parent=39 // pred_region
        %p509 = scmp.lt.s32.totalorder %s15, 1
        %s510 = scalar_select %p509, %s15, 1
        %s511 = smul.addr %s510, 3
        %s512 = smul.addr %s511, 8
        %s513 = scalar_lea.vmem %s3, %s512
      $region44: #{normal_block.1} parent=39 // pred_fallthru
        _
    $region40: #{normal_block.1} parent=5 // pred_fallthru
      _
  $region6: #{normal_block.1} parent=0 // loop_footer
    %s13 = sadd.s32 1, %s9
  $region7: #{normal_block.1} parent=0 // loop_footer_branch
    %8 = sbr.rel target = $region3
  $region8: #{normal_block.1} parent=0 // loop_exit
    _

</llo_original>
